<compile_context>
chip_gen: v5e
topology: v5e:2x2
jax: 0.10.0
libtpu: 0.0.40
codegen_flags: <defaults>
</compile_context>

<pallas_src>
from functools import partial

import jax
import jax.numpy as jnp
from jax import lax
from jax.experimental import pallas as pl
from jax.experimental.pallas import tpu as pltpu

HIDDEN = 32


def _round_up(x, m):
    return ((x + m - 1) // m) * m


def _policy_kernel(opts_ref, ctx_ref, w1o_ref, w1cb_ref, w2_ref, b2_ref,
                   w3_ref, b3_ref, pi_ref, act_ref, *, n_options, tb):
    n = n_options
    tbn = tb * n

    opts = opts_ref[...]      # (tbn, opt_w)  rows option-major: j = opt*tb + eval
    ctxa = ctx_ref[...]       # (tb, cxt_w+1) last column is 1.0 (folds b1)
    w1o = w1o_ref[...]        # (32, opt_w)
    w1cb = w1cb_ref[...]      # (32, cxt_w+1) = [W1_ctx | b1]
    w2 = w2_ref[...]          # (32, 32)
    b2 = b2_ref[...]          # (32, 1)
    w3 = w3_ref[...]          # (32, 1)
    b3 = b3_ref[...]          # (1, 1)

    cdims = (((1,), (1,)), ((), ()))

    # Layer 1, options part: (32, opt_w) x (tbn, opt_w)^T -> (32, tbn) on MXU.
    h1 = lax.dot_general(w1o, opts, cdims, preferred_element_type=jnp.float32)
    # Context + b1 folded once per evaluation: (32, cxt+1) x (tb, cxt+1)^T.
    b1_eff = lax.dot_general(w1cb, ctxa, cdims,
                             preferred_element_type=jnp.float32)    # (32, tb)
    # Option-major lane order -> per-evaluation bias broadcast is a lane tile.
    b1_full = jnp.concatenate([b1_eff] * n, axis=-1)                # (32, tbn)
    h1 = jnp.maximum(h1 + b1_full, 0.0)

    # Layer 2: (32, 32) x (32, tbn) -> (32, tbn) on MXU.
    h2 = jnp.dot(w2, h1, preferred_element_type=jnp.float32) + b2
    h2 = jnp.maximum(h2, 0.0)

    # Layer 3 on the VPU + one sublane reduce: logits (1, tbn).
    raw = jnp.sum(w3 * h2, axis=0, keepdims=True) + b3

    # Per-evaluation softmax / argmax.  Option i of every evaluation lives in
    # the contiguous lane slice [i*tb, (i+1)*tb), so everything below is
    # elementwise over N static lane slices (no cross-lane shuffles).
    chunks = [raw[:, i * tb:(i + 1) * tb] for i in range(n)]        # each (1, tb)

    m = chunks[0]
    for i in range(1, n):
        m = jnp.maximum(m, chunks[i])
    exps = [jnp.exp(c - m) for c in chunks]
    s = exps[0]
    for i in range(1, n):
        s = s + exps[i]
    pis = [e / s for e in exps]                                     # exact softmax
    pi_flat = jnp.concatenate(pis, axis=-1)                         # (1, tbn)
    pi_ref[...] = pi_flat[None]                                     # lane-dense row

    # First-max argmax (matches torch/jnp tie-breaking): strict '>' updates.
    best_val = chunks[0]
    best_idx = jnp.zeros((1, tb), jnp.int32)
    for i in range(1, n):
        upd = chunks[i] > best_val
        best_idx = jnp.where(upd, jnp.int32(i), best_idx)
        best_val = jnp.where(upd, chunks[i], best_val)
    act_ref[...] = best_idx[None]                                   # (1, 1, tb)


def perm_inv_policy_forward_batched(context_b, options_b, params, tb=None):
    """B independent policy evaluations.

    context_b: (B, cxt_width), options_b: (B, N, opt_width).
    Returns (pi (B, N) float32, action (B,) int32).
    """
    w1o, w1cb, w2, b2, w3, b3 = params
    B, n, opt_w = options_b.shape
    cxt_w = context_b.shape[-1]

    # Evaluations per grid block.  Default: whole batch in one block up to 128
    # (fewest grid steps, best on single-TC v5e/v6e); 128-eval blocks beyond
    # that (>= 2 blocks -> megacore sharding on v7x).  Caller may override.
    if tb is None:
        tb = min(128, _round_up(B, 8))
    tb = max(8, _round_up(tb, 8))
    b_pad = _round_up(B, tb)
    num_blocks = b_pad // tb
    tbn = tb * n

    opts = jnp.pad(options_b.astype(jnp.float32),
                   ((0, b_pad - B), (0, 0), (0, 0)))
    ctx = jnp.pad(context_b.astype(jnp.float32), ((0, b_pad - B), (0, 0)))
    ctx_aug = jnp.concatenate([ctx, jnp.ones((b_pad, 1), jnp.float32)], axis=-1)
    # Option-major within each block: global row index = g*tbn + opt*tb + eval.
    opts_om = (opts.reshape(num_blocks, tb, n, opt_w)
                   .transpose(0, 2, 1, 3)
                   .reshape(num_blocks * tbn, opt_w))

    kernel = partial(_policy_kernel, n_options=n, tb=tb)

    pi_raw, act_raw = pl.pallas_call(
        kernel,
        out_shape=(jax.ShapeDtypeStruct((num_blocks, 1, tbn), jnp.float32),
                   jax.ShapeDtypeStruct((num_blocks, 1, tb), jnp.int32)),
        grid=(num_blocks,),
        in_specs=[
            pl.BlockSpec((tbn, opt_w), lambda g: (g, 0)),
            pl.BlockSpec((tb, cxt_w + 1), lambda g: (g, 0)),
            # Parameters stay resident: same block for every grid step.
            pl.BlockSpec(w1o.shape, lambda g: (0, 0)),
            pl.BlockSpec(w1cb.shape, lambda g: (0, 0)),
            pl.BlockSpec(w2.shape, lambda g: (0, 0)),
            pl.BlockSpec(b2.shape, lambda g: (0, 0)),
            pl.BlockSpec(w3.shape, lambda g: (0, 0)),
            pl.BlockSpec(b3.shape, lambda g: (0, 0)),
        ],
        out_specs=(
            pl.BlockSpec((1, 1, tbn), lambda g: (g, 0, 0)),
            pl.BlockSpec((1, 1, tb), lambda g: (g, 0, 0)),
        ),
        compiler_params=pltpu.CompilerParams(
            dimension_semantics=("parallel",)),
    )(opts_om, ctx_aug, w1o, w1cb, w2, b2, w3, b3)

    # Undo the option-major lane ordering and drop the batch padding.
    pi = (pi_raw.reshape(num_blocks, n, tb)
                .transpose(0, 2, 1)
                .reshape(b_pad, n))[:B]
    act = act_raw.reshape(b_pad)[:B]
    return pi, act


def perm_inv_policy_forward(context, options, params):
    """Single forward matching PermInvPolicyNet.forward; returns (pi (N,), action)."""
    n = options.shape[0]
    pi, act = perm_inv_policy_forward_batched(
        context.reshape(1, -1), options.reshape(1, n, -1), params)
    return pi[0], act[0]


def init_params(key, obs_width):
    """PyTorch-layout (out, in) Linear params with default uniform +-1/sqrt(fan_in)."""
    def linear(k, fan_in, fan_out):
        kw, kb = jax.random.split(k)
        bound = 1.0 / jnp.sqrt(jnp.float32(fan_in))
        w = jax.random.uniform(kw, (fan_out, fan_in), jnp.float32, -bound, bound)
        b = jax.random.uniform(kb, (fan_out,), jnp.float32, -bound, bound)
        return w, b

    k1, k2, k3 = jax.random.split(key, 3)
    w1, b1 = linear(k1, obs_width, HIDDEN)
    w2, b2 = linear(k2, HIDDEN, HIDDEN)
    w3, b3 = linear(k3, HIDDEN, 1)
    return w1, b1, w2, b2, w3, b3


def pack_params(w1, b1, w2, b2, w3, b3, opt_width):
    """One-time packing: all kernel operands lane-0 aligned, b1 folded into W1c."""
    w1o = w1[:, :opt_width].astype(jnp.float32)                    # (32, opt_w)
    w1cb = jnp.concatenate(
        [w1[:, opt_width:], b1.reshape(HIDDEN, 1)], axis=1
    ).astype(jnp.float32)                                          # (32, cxt_w + 1)
    return (w1o, w1cb,
            w2.astype(jnp.float32),
            b2.reshape(HIDDEN, 1).astype(jnp.float32),
            w3.reshape(HIDDEN, 1).astype(jnp.float32),
            b3.reshape(1, 1).astype(jnp.float32))


def reference_forward(context, options, w1, b1, w2, b2, w3, b3):
    """Pure-JAX re-implementation of the PyTorch module (for checking)."""
    n = options.shape[0]
    aux = jnp.broadcast_to(context.reshape(1, -1), (n, context.shape[-1]))
    obs = jnp.concatenate([options, aux], axis=-1)
    h1 = jnp.maximum(obs @ w1.T + b1, 0.0)
    h2 = jnp.maximum(h1 @ w2.T + b2, 0.0)
    raw = (h2 @ w3.T)[:, 0] + b3[0]
    pi = jax.nn.softmax(raw, axis=-1)
    return pi, jnp.argmax(pi)


if __name__ == "__main__":
    N_OPTIONS = 8
    OPT_WIDTH = 12
    CXT_WIDTH = 4
    OBS_WIDTH = OPT_WIDTH + CXT_WIDTH

    key = jax.random.PRNGKey(0)
    k_ctx, k_opt, k_par = jax.random.split(key, 3)

    context = jax.random.normal(k_ctx, (CXT_WIDTH,), jnp.float32)
    options = jax.random.normal(k_opt, (N_OPTIONS, OPT_WIDTH), jnp.float32)
    raw_params = init_params(k_par, OBS_WIDTH)
    params = pack_params(*raw_params, opt_width=OPT_WIDTH)

    # Single forward (B = 1), matching PermInvPolicyNet.forward.
    pi, action = perm_inv_policy_forward(context, options, params)
    pi = jax.block_until_ready(pi)
    action = jax.block_until_ready(action)

    pi_ref, act_ref = reference_forward(context, options, *raw_params)
    assert abs(float(jnp.sum(pi)) - 1.0) < 1e-3
    assert float(jnp.max(jnp.abs(pi - pi_ref))) < 1e-3
    chosen = int(action)                 # matches torch .item() -> python int
    assert 0 <= chosen < N_OPTIONS
    assert chosen == int(act_ref)

    # Batched evaluation (TB evaluations per grid block, lane-dense stores).
    B = 5                                # non-multiple of 8: exercises padding
    kb1, kb2 = jax.random.split(jax.random.PRNGKey(1))
    ctx_b = jax.random.normal(kb1, (B, CXT_WIDTH), jnp.float32)
    opt_b = jax.random.normal(kb2, (B, N_OPTIONS, OPT_WIDTH), jnp.float32)
    pi_b, act_b = perm_inv_policy_forward_batched(ctx_b, opt_b, params)
    pi_b = jax.block_until_ready(pi_b)
    act_b = jax.block_until_ready(act_b)
    assert pi_b.shape == (B, N_OPTIONS) and act_b.shape == (B,)
    for b in range(B):
        pr, ar = reference_forward(ctx_b[b], opt_b[b], *raw_params)
        assert float(jnp.max(jnp.abs(pi_b[b] - pr))) < 1e-3
        assert int(act_b[b]) == int(ar)

    print("KERNEL_OK")
</pallas_src>

<mosaic_0001>
module attributes {stable_mosaic.version = 11 : i64} {
  func.func @_policy_kernel(%arg0: i32, %arg1: memref<64x12xf32, #tpu.memory_space<vmem>>, %arg2: memref<8x5xf32, #tpu.memory_space<vmem>>, %arg3: memref<32x12xf32, #tpu.memory_space<vmem>>, %arg4: memref<32x5xf32, #tpu.memory_space<vmem>>, %arg5: memref<32x32xf32, #tpu.memory_space<vmem>>, %arg6: memref<32x1xf32, #tpu.memory_space<vmem>>, %arg7: memref<32x1xf32, #tpu.memory_space<vmem>>, %arg8: memref<1x1xf32, #tpu.memory_space<vmem>>, %arg9: memref<1x1x64xf32, #tpu.memory_space<vmem>>, %arg10: memref<1x1x8xi32, #tpu.memory_space<vmem>>) attributes {dimension_semantics = [#tpu.dimension_semantics<parallel>], iteration_bounds = array<i64: 1>, scalar_prefetch = 0 : i64, scratch_operands = 0 : i64, tpu.core_type = #tpu.core_type<tc>, window_params = [{transform_indices = @transform_0, window_bounds = array<i64: 64, 12>}, {transform_indices = @transform_1, window_bounds = array<i64: 8, 5>}, {pipeline_mode = #tpu.pipeline_mode<synchronous>, transform_indices = @transform_2, window_bounds = array<i64: 32, 12>}, {pipeline_mode = #tpu.pipeline_mode<synchronous>, transform_indices = @transform_3, window_bounds = array<i64: 32, 5>}, {pipeline_mode = #tpu.pipeline_mode<synchronous>, transform_indices = @transform_4, window_bounds = array<i64: 32, 32>}, {pipeline_mode = #tpu.pipeline_mode<synchronous>, transform_indices = @transform_5, window_bounds = array<i64: 32, 1>}, {pipeline_mode = #tpu.pipeline_mode<synchronous>, transform_indices = @transform_6, window_bounds = array<i64: 32, 1>}, {pipeline_mode = #tpu.pipeline_mode<synchronous>, transform_indices = @transform_7, window_bounds = array<i64: 1, 1>}, {transform_indices = @transform_8, window_bounds = array<i64: 1, 1, 64>}, {transform_indices = @transform_9, window_bounds = array<i64: 1, 1, 8>}]} {
    %c0 = arith.constant 0 : index
    %c0_0 = arith.constant 0 : index
    %0 = vector.load %arg1[%c0, %c0_0] : memref<64x12xf32, #tpu.memory_space<vmem>>, vector<64x12xf32>
    %c0_1 = arith.constant 0 : index
    %c0_2 = arith.constant 0 : index
    %1 = vector.load %arg2[%c0_1, %c0_2] : memref<8x5xf32, #tpu.memory_space<vmem>>, vector<8x5xf32>
    %c0_3 = arith.constant 0 : index
    %c0_4 = arith.constant 0 : index
    %2 = vector.load %arg3[%c0_3, %c0_4] : memref<32x12xf32, #tpu.memory_space<vmem>>, vector<32x12xf32>
    %c0_5 = arith.constant 0 : index
    %c0_6 = arith.constant 0 : index
    %3 = vector.load %arg4[%c0_5, %c0_6] : memref<32x5xf32, #tpu.memory_space<vmem>>, vector<32x5xf32>
    %c0_7 = arith.constant 0 : index
    %c0_8 = arith.constant 0 : index
    %4 = vector.load %arg5[%c0_7, %c0_8] : memref<32x32xf32, #tpu.memory_space<vmem>>, vector<32x32xf32>
    %c0_9 = arith.constant 0 : index
    %c0_10 = arith.constant 0 : index
    %5 = vector.load %arg6[%c0_9, %c0_10] : memref<32x1xf32, #tpu.memory_space<vmem>>, vector<32x1xf32>
    %c0_11 = arith.constant 0 : index
    %c0_12 = arith.constant 0 : index
    %6 = vector.load %arg7[%c0_11, %c0_12] : memref<32x1xf32, #tpu.memory_space<vmem>>, vector<32x1xf32>
    %c0_13 = arith.constant 0 : index
    %c0_14 = arith.constant 0 : index
    %7 = vector.load %arg8[%c0_13, %c0_14] : memref<1x1xf32, #tpu.memory_space<vmem>>, vector<1x1xf32>
    %cst = arith.constant dense<0.000000e+00> : vector<32x64xf32>
    %8 = tpu.matmul %2, %0, %cst {dimension_numbers = #tpu.dot_dimension_numbers<[1], [1], [0], [0], [0, 0, 1, 0], [], []>} : vector<32x12xf32>, vector<64x12xf32>, vector<32x64xf32> -> vector<32x64xf32>
    %cst_15 = arith.constant dense<0.000000e+00> : vector<32x8xf32>
    %9 = tpu.matmul %3, %1, %cst_15 {dimension_numbers = #tpu.dot_dimension_numbers<[1], [1], [0], [0], [0, 0, 1, 0], [], []>} : vector<32x5xf32>, vector<8x5xf32>, vector<32x8xf32> -> vector<32x8xf32>
    %10 = tpu.concatenate %9, %9, %9, %9, %9, %9, %9, %9 in 1 : vector<32x8xf32>, vector<32x8xf32>, vector<32x8xf32>, vector<32x8xf32>, vector<32x8xf32>, vector<32x8xf32>, vector<32x8xf32>, vector<32x8xf32> -> vector<32x64xf32>
    %11 = arith.addf %8, %10 : vector<32x64xf32>
    %cst_16 = arith.constant 0.000000e+00 : f32
    %12 = vector.broadcast %cst_16 : f32 to vector<32x64xf32>
    %13 = arith.maximumf %11, %12 : vector<32x64xf32>
    %cst_17 = arith.constant dense<0.000000e+00> : vector<32x64xf32>
    %14 = tpu.matmul %4, %13, %cst_17 {dimension_numbers = #tpu.dot_dimension_numbers<[1], [0], [0], [1], [0, 0, 1, 1], [], []>} : vector<32x32xf32>, vector<32x64xf32>, vector<32x64xf32> -> vector<32x64xf32>
    %15 = vector.broadcast %5 : vector<32x1xf32> to vector<32x64xf32>
    %16 = arith.addf %14, %15 : vector<32x64xf32>
    %cst_18 = arith.constant 0.000000e+00 : f32
    %17 = vector.broadcast %cst_18 : f32 to vector<32x64xf32>
    %18 = arith.maximumf %16, %17 : vector<32x64xf32>
    %19 = vector.broadcast %6 : vector<32x1xf32> to vector<32x64xf32>
    %20 = arith.mulf %19, %18 : vector<32x64xf32>
    %cst_19 = arith.constant dense<0.000000e+00> : vector<64xf32>
    %21 = vector.multi_reduction <add>, %20, %cst_19 [0] : vector<32x64xf32> to vector<64xf32>
    %22 = vector.shape_cast %21 : vector<64xf32> to vector<1x64xf32>
    %23 = vector.broadcast %7 : vector<1x1xf32> to vector<1x64xf32>
    %24 = arith.addf %22, %23 : vector<1x64xf32>
    %25 = vector.extract_strided_slice %24 {offsets = [0, 0], sizes = [1, 8], strides = [1, 1]} : vector<1x64xf32> to vector<1x8xf32>
    %26 = vector.extract_strided_slice %24 {offsets = [0, 8], sizes = [1, 8], strides = [1, 1]} : vector<1x64xf32> to vector<1x8xf32>
    %27 = vector.extract_strided_slice %24 {offsets = [0, 16], sizes = [1, 8], strides = [1, 1]} : vector<1x64xf32> to vector<1x8xf32>
    %28 = vector.extract_strided_slice %24 {offsets = [0, 24], sizes = [1, 8], strides = [1, 1]} : vector<1x64xf32> to vector<1x8xf32>
    %29 = vector.extract_strided_slice %24 {offsets = [0, 32], sizes = [1, 8], strides = [1, 1]} : vector<1x64xf32> to vector<1x8xf32>
    %30 = vector.extract_strided_slice %24 {offsets = [0, 40], sizes = [1, 8], strides = [1, 1]} : vector<1x64xf32> to vector<1x8xf32>
    %31 = vector.extract_strided_slice %24 {offsets = [0, 48], sizes = [1, 8], strides = [1, 1]} : vector<1x64xf32> to vector<1x8xf32>
    %32 = vector.extract_strided_slice %24 {offsets = [0, 56], sizes = [1, 8], strides = [1, 1]} : vector<1x64xf32> to vector<1x8xf32>
    %33 = arith.maximumf %25, %26 : vector<1x8xf32>
    %34 = arith.maximumf %33, %27 : vector<1x8xf32>
    %35 = arith.maximumf %34, %28 : vector<1x8xf32>
    %36 = arith.maximumf %35, %29 : vector<1x8xf32>
    %37 = arith.maximumf %36, %30 : vector<1x8xf32>
    %38 = arith.maximumf %37, %31 : vector<1x8xf32>
    %39 = arith.maximumf %38, %32 : vector<1x8xf32>
    %40 = arith.subf %25, %39 : vector<1x8xf32>
    %41 = math.exp %40 : vector<1x8xf32>
    %42 = arith.subf %26, %39 : vector<1x8xf32>
    %43 = math.exp %42 : vector<1x8xf32>
    %44 = arith.subf %27, %39 : vector<1x8xf32>
    %45 = math.exp %44 : vector<1x8xf32>
    %46 = arith.subf %28, %39 : vector<1x8xf32>
    %47 = math.exp %46 : vector<1x8xf32>
    %48 = arith.subf %29, %39 : vector<1x8xf32>
    %49 = math.exp %48 : vector<1x8xf32>
    %50 = arith.subf %30, %39 : vector<1x8xf32>
    %51 = math.exp %50 : vector<1x8xf32>
    %52 = arith.subf %31, %39 : vector<1x8xf32>
    %53 = math.exp %52 : vector<1x8xf32>
    %54 = arith.subf %32, %39 : vector<1x8xf32>
    %55 = math.exp %54 : vector<1x8xf32>
    %56 = arith.addf %41, %43 : vector<1x8xf32>
    %57 = arith.addf %56, %45 : vector<1x8xf32>
    %58 = arith.addf %57, %47 : vector<1x8xf32>
    %59 = arith.addf %58, %49 : vector<1x8xf32>
    %60 = arith.addf %59, %51 : vector<1x8xf32>
    %61 = arith.addf %60, %53 : vector<1x8xf32>
    %62 = arith.addf %61, %55 : vector<1x8xf32>
    %63 = arith.divf %41, %62 : vector<1x8xf32>
    %64 = arith.divf %43, %62 : vector<1x8xf32>
    %65 = arith.divf %45, %62 : vector<1x8xf32>
    %66 = arith.divf %47, %62 : vector<1x8xf32>
    %67 = arith.divf %49, %62 : vector<1x8xf32>
    %68 = arith.divf %51, %62 : vector<1x8xf32>
    %69 = arith.divf %53, %62 : vector<1x8xf32>
    %70 = arith.divf %55, %62 : vector<1x8xf32>
    %71 = tpu.concatenate %63, %64, %65, %66, %67, %68, %69, %70 in 1 : vector<1x8xf32>, vector<1x8xf32>, vector<1x8xf32>, vector<1x8xf32>, vector<1x8xf32>, vector<1x8xf32>, vector<1x8xf32>, vector<1x8xf32> -> vector<1x64xf32>
    %72 = vector.shape_cast %71 : vector<1x64xf32> to vector<1x1x64xf32>
    %c0_20 = arith.constant 0 : index
    %c0_21 = arith.constant 0 : index
    %c0_22 = arith.constant 0 : index
    %73 = vector.load %arg9[%c0_20, %c0_21, %c0_22] : memref<1x1x64xf32, #tpu.memory_space<vmem>>, vector<1x1x64xf32>
    tpu.vector_store %arg9[%c0_20, %c0_21, %c0_22], %72 {strides = array<i32>} : memref<1x1x64xf32, #tpu.memory_space<vmem>>, vector<1x1x64xf32>,
    %c0_i32 = arith.constant 0 : i32
    %74 = vector.broadcast %c0_i32 : i32 to vector<1x8xi32>
    %75 = arith.cmpf ogt, %26, %25 : vector<1x8xf32>
    %c1_i32 = arith.constant 1 : i32
    %76 = vector.broadcast %c1_i32 : i32 to vector<1x8xi32>
    %77 = arith.select %75, %76, %74 : vector<1x8xi1>, vector<1x8xi32>
    %78 = arith.select %75, %26, %25 : vector<1x8xi1>, vector<1x8xf32>
    %79 = arith.cmpf ogt, %27, %78 : vector<1x8xf32>
    %c2_i32 = arith.constant 2 : i32
    %80 = vector.broadcast %c2_i32 : i32 to vector<1x8xi32>
    %81 = arith.select %79, %80, %77 : vector<1x8xi1>, vector<1x8xi32>
    %82 = arith.select %79, %27, %78 : vector<1x8xi1>, vector<1x8xf32>
    %83 = arith.cmpf ogt, %28, %82 : vector<1x8xf32>
    %c3_i32 = arith.constant 3 : i32
    %84 = vector.broadcast %c3_i32 : i32 to vector<1x8xi32>
    %85 = arith.select %83, %84, %81 : vector<1x8xi1>, vector<1x8xi32>
    %86 = arith.select %83, %28, %82 : vector<1x8xi1>, vector<1x8xf32>
    %87 = arith.cmpf ogt, %29, %86 : vector<1x8xf32>
    %c4_i32 = arith.constant 4 : i32
    %88 = vector.broadcast %c4_i32 : i32 to vector<1x8xi32>
    %89 = arith.select %87, %88, %85 : vector<1x8xi1>, vector<1x8xi32>
    %90 = arith.select %87, %29, %86 : vector<1x8xi1>, vector<1x8xf32>
    %91 = arith.cmpf ogt, %30, %90 : vector<1x8xf32>
    %c5_i32 = arith.constant 5 : i32
    %92 = vector.broadcast %c5_i32 : i32 to vector<1x8xi32>
    %93 = arith.select %91, %92, %89 : vector<1x8xi1>, vector<1x8xi32>
    %94 = arith.select %91, %30, %90 : vector<1x8xi1>, vector<1x8xf32>
    %95 = arith.cmpf ogt, %31, %94 : vector<1x8xf32>
    %c6_i32 = arith.constant 6 : i32
    %96 = vector.broadcast %c6_i32 : i32 to vector<1x8xi32>
    %97 = arith.select %95, %96, %93 : vector<1x8xi1>, vector<1x8xi32>
    %98 = arith.select %95, %31, %94 : vector<1x8xi1>, vector<1x8xf32>
    %99 = arith.cmpf ogt, %32, %98 : vector<1x8xf32>
    %c7_i32 = arith.constant 7 : i32
    %100 = vector.broadcast %c7_i32 : i32 to vector<1x8xi32>
    %101 = arith.select %99, %100, %97 : vector<1x8xi1>, vector<1x8xi32>
    %102 = vector.shape_cast %101 : vector<1x8xi32> to vector<1x1x8xi32>
    %c0_23 = arith.constant 0 : index
    %c0_24 = arith.constant 0 : index
    %c0_25 = arith.constant 0 : index
    %103 = vector.load %arg10[%c0_23, %c0_24, %c0_25] : memref<1x1x8xi32, #tpu.memory_space<vmem>>, vector<1x1x8xi32>
    tpu.vector_store %arg10[%c0_23, %c0_24, %c0_25], %102 {strides = array<i32>} : memref<1x1x8xi32, #tpu.memory_space<vmem>>, vector<1x1x8xi32>,
    return
  }
  func.func @transform_0(%arg0: i32) -> (i32, i32) {
    %c0_i32 = arith.constant 0 : i32
    %c0_i32_0 = arith.constant 0 : i32
    return %arg0, %c0_i32 : i32, i32
  }
  func.func @transform_1(%arg0: i32) -> (i32, i32) {
    %c0_i32 = arith.constant 0 : i32
    %c0_i32_0 = arith.constant 0 : i32
    return %arg0, %c0_i32 : i32, i32
  }
  func.func @transform_2(%arg0: i32) -> (i32, i32) {
    %c0_i32 = arith.constant 0 : i32
    %c0_i32_0 = arith.constant 0 : i32
    %c0_i32_1 = arith.constant 0 : i32
    return %c0_i32, %c0_i32_0 : i32, i32
  }
  func.func @transform_3(%arg0: i32) -> (i32, i32) {
    %c0_i32 = arith.constant 0 : i32
    %c0_i32_0 = arith.constant 0 : i32
    %c0_i32_1 = arith.constant 0 : i32
    return %c0_i32, %c0_i32_0 : i32, i32
  }
  func.func @transform_4(%arg0: i32) -> (i32, i32) {
    %c0_i32 = arith.constant 0 : i32
    %c0_i32_0 = arith.constant 0 : i32
    %c0_i32_1 = arith.constant 0 : i32
    return %c0_i32, %c0_i32_0 : i32, i32
  }
  func.func @transform_5(%arg0: i32) -> (i32, i32) {
    %c0_i32 = arith.constant 0 : i32
    %c0_i32_0 = arith.constant 0 : i32
    %c0_i32_1 = arith.constant 0 : i32
    return %c0_i32, %c0_i32_0 : i32, i32
  }
  func.func @transform_6(%arg0: i32) -> (i32, i32) {
    %c0_i32 = arith.constant 0 : i32
    %c0_i32_0 = arith.constant 0 : i32
    %c0_i32_1 = arith.constant 0 : i32
    return %c0_i32, %c0_i32_0 : i32, i32
  }
  func.func @transform_7(%arg0: i32) -> (i32, i32) {
    %c0_i32 = arith.constant 0 : i32
    %c0_i32_0 = arith.constant 0 : i32
    %c0_i32_1 = arith.constant 0 : i32
    return %c0_i32, %c0_i32_0 : i32, i32
  }
  func.func @transform_8(%arg0: i32) -> (i32, i32, i32) {
    %c0_i32 = arith.constant 0 : i32
    %c0_i32_0 = arith.constant 0 : i32
    %c0_i32_1 = arith.constant 0 : i32
    return %arg0, %c0_i32, %c0_i32_0 : i32, i32, i32
  }
  func.func @transform_9(%arg0: i32) -> (i32, i32, i32) {
    %c0_i32 = arith.constant 0 : i32
    %c0_i32_0 = arith.constant 0 : i32
    %c0_i32_1 = arith.constant 0 : i32
    return %arg0, %c0_i32, %c0_i32_0 : i32, i32, i32
  }
}

</mosaic_0001>

<llo_original>
// kernel: tpu_custom_call.1
$region0: #{tpu_custom_call.1}
  #allocation0 [shape = 'u32[]', space=smem, size = 0x4, offset = 0x4, fixed_abs, tag = 'smem constant byte address 0x4 - core index']
  #allocation1 [shape = 'u32[72,128]{1,0:T(1,128)}', space=vmem, size = 0x9000, scoped, tag = 'internal scratch']
  #allocation2 [shape = 'f32[1,1]{1,0:T(1,128)S(1)}', space=vmem, size = 0x200, scoped, tag = 'scoped memory for tpu_custom_call.1']
  %s0 = inlined_call_operand.vmem [shape: f32[64,12], index: 0, kind: input, shape index: {}]
  %s1 = inlined_call_operand.vmem [shape: f32[8,5], index: 1, kind: input, shape index: {}]
  %s2 = inlined_call_operand.vmem [shape: f32[32,12], index: 2, kind: input, shape index: {}]
  %s3 = inlined_call_operand.vmem [shape: f32[32,5], index: 3, kind: input, shape index: {}]
  %s4 = inlined_call_operand.vmem [shape: f32[32,32], index: 4, kind: input, shape index: {}]
  %s5 = inlined_call_operand.vmem [shape: f32[32,1], index: 5, kind: input, shape index: {}]
  %s6 = inlined_call_operand.vmem [shape: f32[32,1], index: 6, kind: input, shape index: {}]
  %s7 = inlined_call_operand.<no memory space> [shape: f32[1,1], index: 7, kind: input, shape index: {}]
  %s8 = inlined_call_operand.hbm [shape: f32[1,1,64], index: 8, kind: output, shape index: {0}]
  %s9 = inlined_call_operand.hbm [shape: s32[1,1,8], index: 9, kind: output, shape index: {1}]
  %10 = xla_tuple %s8, %s9
  %s11 = sld [smem:[#allocation0]]
  $region50: #{tpu_custom_call.1} parent=0
    _
  %s13 = ssub.s32 1, %s11
  %s14 = scalar_select 0, %s13, %s11
  %v15 = vstv %s7
  %16 = vst [vmem:[#allocation2] sm:$0x1] %v15
  $region1: #{tpu_custom_call.1} parent=0
    #allocation3 [shape = 'u8[512]{0}', space=vmem, size = 0x400, scoped, tag = 'output window, operand 0, single buffered']
    #allocation4 [shape = 's32[1]{0}', space=sflag, size = 0x4, scoped, tag = 'scoped memory for tpu_custom_call.1']
    #allocation5 [shape = 'u8[512]{0}', space=vmem, size = 0x400, scoped, tag = 'output window, operand 1, single buffered']
    #allocation6 [shape = 's32[1]{0}', space=sflag, size = 0x4, scoped, tag = 'scoped memory for tpu_custom_call.1']
    %17 = vsyncpa [#allocation4], 0
    %18 = vsyncpa [#allocation6], 0
    // Predicated region
    $region2: #{tpu_custom_call.1} parent=1 // pred_check
      _
    $region3: #{tpu_custom_call.1} parent=1 // pred_check_branch
      %20 = sbr.rel (0) target = $region5
    $region4: #{tpu_custom_call.1} parent=1 // pred_region
      _
    $region5: #{tpu_custom_call.1} parent=1 // pred_fallthru
      _
    // Predicated region
    $region6: #{tpu_custom_call.1} parent=1 // pred_check
      _
    $region7: #{tpu_custom_call.1} parent=1 // pred_check_branch
      %22 = sbr.rel (0) target = $region9
    $region8: #{tpu_custom_call.1} parent=1 // pred_region
      _
    $region9: #{tpu_custom_call.1} parent=1 // pred_fallthru
      _
    // Predicated region
    $region10: #{tpu_custom_call.1} parent=1 // pred_check
      _
    $region11: #{tpu_custom_call.1} parent=1 // pred_check_branch
      %24 = sbr.rel (0) target = $region13
    $region12: #{tpu_custom_call.1} parent=1 // pred_region
      _
    $region13: #{tpu_custom_call.1} parent=1 // pred_fallthru
      _
    // Predicated region
    $region14: #{tpu_custom_call.1} parent=1 // pred_check
      _
    $region15: #{tpu_custom_call.1} parent=1 // pred_check_branch
      %26 = sbr.rel (0) target = $region17
    $region16: #{tpu_custom_call.1} parent=1 // pred_region
      _
    $region17: #{tpu_custom_call.1} parent=1 // pred_fallthru
      _
    // Predicated region
    $region18: #{tpu_custom_call.1} parent=1 // pred_check
      _
    $region19: #{tpu_custom_call.1} parent=1 // pred_check_branch
      %28 = sbr.rel (0) target = $region21
    $region20: #{tpu_custom_call.1} parent=1 // pred_region
      _
    $region21: #{tpu_custom_call.1} parent=1 // pred_fallthru
      _
    // Predicated region
    $region22: #{tpu_custom_call.1} parent=1 // pred_check
      _
    $region23: #{tpu_custom_call.1} parent=1 // pred_check_branch
      %30 = sbr.rel (0) target = $region25
    $region24: #{tpu_custom_call.1} parent=1 // pred_region
      _
    $region25: #{tpu_custom_call.1} parent=1 // pred_fallthru
      _
    // Predicated region
    $region26: #{tpu_custom_call.1} parent=1 // pred_check
      _
    $region27: #{tpu_custom_call.1} parent=1 // pred_check_branch
      %32 = sbr.rel (0) target = $region29
    $region28: #{tpu_custom_call.1} parent=1 // pred_region
      _
    $region29: #{tpu_custom_call.1} parent=1 // pred_fallthru
      _
    // Predicated region
    $region30: #{tpu_custom_call.1} parent=1 // pred_check
      _
    $region31: #{tpu_custom_call.1} parent=1 // pred_check_branch
      %34 = sbr.rel (0) target = $region33
    $region32: #{tpu_custom_call.1} parent=1 // pred_region
      _
    $region33: #{tpu_custom_call.1} parent=1 // pred_fallthru
      _
    %v35 = vld [vmem:[%s0] sm:$0xff]
    %v36 = vld [vmem:[%s0 + $0x8] sm:$0xff]
    %v37 = vld [vmem:[%s0 + $0x10] sm:$0xff]
    %v38 = vld [vmem:[%s0 + $0x18] sm:$0xff]
    %v39 = vld [vmem:[%s0 + $0x20] sm:$0xff]
    %v40 = vld [vmem:[%s0 + $0x28] sm:$0xff]
    %v41 = vld [vmem:[%s0 + $0x30] sm:$0xff]
    %v42 = vld [vmem:[%s0 + $0x38] sm:$0xff]
    %v43 = vld [vmem:[%s1] sm:$0xff]
    %v44 = vld [vmem:[%s2] sm:$0xff]
    %v45 = vld [vmem:[%s2 + $0x8] sm:$0xff]
    %v46 = vld [vmem:[%s2 + $0x10] sm:$0xff]
    %v47 = vld [vmem:[%s2 + $0x18] sm:$0xff]
    %v48 = vld [vmem:[%s3] sm:$0xff]
    %v49 = vld [vmem:[%s3 + $0x8] sm:$0xff]
    %v50 = vld [vmem:[%s3 + $0x10] sm:$0xff]
    %v51 = vld [vmem:[%s3 + $0x18] sm:$0xff]
    %v52 = vld [vmem:[%s4] sm:$0xff]
    %v53 = vld [vmem:[%s4 + $0x8] sm:$0xff]
    %v54 = vld [vmem:[%s4 + $0x10] sm:$0xff]
    %v55 = vld [vmem:[%s4 + $0x18] sm:$0xff]
    %v56 = vld [vmem:[%s5] sm:$0xff]
    %v57 = vld [vmem:[%s5 + $0x8] sm:$0xff]
    %v58 = vld [vmem:[%s5 + $0x10] sm:$0xff]
    %v59 = vld [vmem:[%s5 + $0x18] sm:$0xff]
    %v60 = vld [vmem:[%s6] sm:$0xff]
    %v61 = vld [vmem:[%s6 + $0x8] sm:$0xff]
    %v62 = vld [vmem:[%s6 + $0x10] sm:$0xff]
    %v63 = vld [vmem:[%s6 + $0x18] sm:$0xff]
    %v64 = vld [vmem:[#allocation2] sm:$0x1]
    %vm65 = vcmask 39936
    %v67 = vsel %vm65, %v48, 0
    %v70 = vsel %vm65, %v49, 0
    %v73 = vsel %vm65, %v50, 0
    %v76 = vsel %vm65, %v51, 0
    %v79 = vsel %vm65, %v43, 0
    %81 = vmatpush.xpose.msra.mxu0 0.0
    %82 = vmatpush.xpose.msra.mxu0 0.0
    %83 = vmatpush.xpose.msra.mxu0 0.0
    %84 = vmatpush.xpose.msra.mxu0 0.0
    %85 = vmatpush.xpose.msra.mxu0 0.0
    %86 = vmatpush.xpose.msra.mxu0 0.0
    %87 = vmatpush.xpose.msra.mxu0 0.0
    %88 = vmatpush.xpose.msra.mxu0 0.0
    %89 = vmatpush.xpose.msra.mxu0 0.0
    %90 = vmatpush.xpose.msra.mxu0 0.0
    %91 = vmatpush.xpose.msra.mxu0 0.0
    %92 = vmatpush.xpose.msra.mxu0 0.0
    %93 = vmatpush.xpose.msra.mxu0 0.0
    %94 = vmatpush.xpose.msra.mxu0 0.0
    %95 = vmatpush.xpose.msra.mxu0 0.0
    %96 = vmatpush.xpose.msra.mxu0 %v79
    %97 = vmatmul.f32.gmra.mxu0 %v67
    %v98 = vpop.f32.mrf.mxu0
    %v99 = vadd.f32 0.0, %v98
    %100 = vmatmul.f32.gmra.mxu0 %v70
    %v101 = vpop.f32.mrf.mxu0
    %v102 = vadd.f32 0.0, %v101
    %103 = vmatmul.f32.gmra.mxu0 %v73
    %v104 = vpop.f32.mrf.mxu0
    %v105 = vadd.f32 0.0, %v104
    %106 = vmatmul.f32.gmra.mxu0 %v76
    %v107 = vpop.f32.mrf.mxu0
    %v108 = vadd.f32 0.0, %v107
    %109 = vdwg.mxu0
    %114 = vrot.lane.b32.xlu0 %v99, 8
    %v115 = vpop.permute.xlu0 %114
    %116 = vrot.lane.b32.xlu0 %v102, 8
    %v117 = vpop.permute.xlu0 %116
    %118 = vrot.lane.b32.xlu0 %v105, 8
    %v119 = vpop.permute.xlu0 %118
    %120 = vrot.lane.b32.xlu0 %v108, 8
    %v121 = vpop.permute.xlu0 %120
    %126 = vrot.lane.b32.xlu0 %v99, 16
    %v127 = vpop.permute.xlu0 %126
    %128 = vrot.lane.b32.xlu0 %v102, 16
    %v129 = vpop.permute.xlu0 %128
    %130 = vrot.lane.b32.xlu0 %v105, 16
    %v131 = vpop.permute.xlu0 %130
    %132 = vrot.lane.b32.xlu0 %v108, 16
    %v133 = vpop.permute.xlu0 %132
    %138 = vrot.lane.b32.xlu0 %v99, 24
    %v139 = vpop.permute.xlu0 %138
    %140 = vrot.lane.b32.xlu0 %v102, 24
    %v141 = vpop.permute.xlu0 %140
    %142 = vrot.lane.b32.xlu0 %v105, 24
    %v143 = vpop.permute.xlu0 %142
    %144 = vrot.lane.b32.xlu0 %v108, 24
    %v145 = vpop.permute.xlu0 %144
    %150 = vrot.lane.b32.xlu0 %v99, 32
    %v151 = vpop.permute.xlu0 %150
    %152 = vrot.lane.b32.xlu0 %v102, 32
    %v153 = vpop.permute.xlu0 %152
    %154 = vrot.lane.b32.xlu0 %v105, 32
    %v155 = vpop.permute.xlu0 %154
    %156 = vrot.lane.b32.xlu0 %v108, 32
    %v157 = vpop.permute.xlu0 %156
    %162 = vrot.lane.b32.xlu0 %v99, 40
    %v163 = vpop.permute.xlu0 %162
    %164 = vrot.lane.b32.xlu0 %v102, 40
    %v165 = vpop.permute.xlu0 %164
    %166 = vrot.lane.b32.xlu0 %v105, 40
    %v167 = vpop.permute.xlu0 %166
    %168 = vrot.lane.b32.xlu0 %v108, 40
    %v169 = vpop.permute.xlu0 %168
    %174 = vrot.lane.b32.xlu0 %v99, 48
    %v175 = vpop.permute.xlu0 %174
    %176 = vrot.lane.b32.xlu0 %v102, 48
    %v177 = vpop.permute.xlu0 %176
    %178 = vrot.lane.b32.xlu0 %v105, 48
    %v179 = vpop.permute.xlu0 %178
    %180 = vrot.lane.b32.xlu0 %v108, 48
    %v181 = vpop.permute.xlu0 %180
    %186 = vrot.lane.b32.xlu0 %v99, 56
    %v187 = vpop.permute.xlu0 %186
    %188 = vrot.lane.b32.xlu0 %v102, 56
    %v189 = vpop.permute.xlu0 %188
    %190 = vrot.lane.b32.xlu0 %v105, 56
    %v191 = vpop.permute.xlu0 %190
    %192 = vrot.lane.b32.xlu0 %v108, 56
    %v193 = vpop.permute.xlu0 %192
    %vm198 = vcmask 64512
    %v199 = vsel %vm198, %v99, %v115
    %v200 = vsel %vm198, %v102, %v117
    %v201 = vsel %vm198, %v105, %v119
    %v202 = vsel %vm198, %v108, %v121
    %vm203 = vcmask 130048
    %v204 = vsel %vm203, %v199, %v127
    %v205 = vsel %vm203, %v200, %v129
    %v206 = vsel %vm203, %v201, %v131
    %v207 = vsel %vm203, %v202, %v133
    %vm208 = vcmask 195584
    %v209 = vsel %vm208, %v204, %v139
    %v210 = vsel %vm208, %v205, %v141
    %v211 = vsel %vm208, %v206, %v143
    %v212 = vsel %vm208, %v207, %v145
    %vm213 = vcmask 261120
    %v214 = vsel %vm213, %v209, %v151
    %v215 = vsel %vm213, %v210, %v153
    %v216 = vsel %vm213, %v211, %v155
    %v217 = vsel %vm213, %v212, %v157
    %vm218 = vcmask 326656
    %v219 = vsel %vm218, %v214, %v163
    %v220 = vsel %vm218, %v215, %v165
    %v221 = vsel %vm218, %v216, %v167
    %v222 = vsel %vm218, %v217, %v169
    %vm223 = vcmask 392192
    %v224 = vsel %vm223, %v219, %v175
    %v225 = vsel %vm223, %v220, %v177
    %v226 = vsel %vm223, %v221, %v179
    %v227 = vsel %vm223, %v222, %v181
    %vm228 = vcmask 457728
    %v229 = vsel %vm228, %v224, %v187
    %v230 = vsel %vm228, %v225, %v189
    %v231 = vsel %vm228, %v226, %v191
    %v232 = vsel %vm228, %v227, %v193
    %vm233 = vcmask 97280
    %v235 = vsel %vm233, %v44, 0
    %v238 = vsel %vm233, %v45, 0
    %v241 = vsel %vm233, %v46, 0
    %v244 = vsel %vm233, %v47, 0
    %v247 = vsel %vm233, %v35, 0
    %v250 = vsel %vm233, %v36, 0
    %v253 = vsel %vm233, %v37, 0
    %v256 = vsel %vm233, %v38, 0
    %v259 = vsel %vm233, %v39, 0
    %v262 = vsel %vm233, %v40, 0
    %v265 = vsel %vm233, %v41, 0
    %v268 = vsel %vm233, %v42, 0
    %270 = vmatpush.xpose.msra.mxu0 0.0
    %271 = vmatpush.xpose.msra.mxu0 0.0
    %272 = vmatpush.xpose.msra.mxu0 0.0
    %273 = vmatpush.xpose.msra.mxu0 0.0
    %274 = vmatpush.xpose.msra.mxu0 0.0
    %275 = vmatpush.xpose.msra.mxu0 0.0
    %276 = vmatpush.xpose.msra.mxu0 0.0
    %277 = vmatpush.xpose.msra.mxu0 0.0
    %278 = vmatpush.xpose.msra.mxu0 %v268
    %279 = vmatpush.xpose.msra.mxu0 %v265
    %280 = vmatpush.xpose.msra.mxu0 %v262
    %281 = vmatpush.xpose.msra.mxu0 %v259
    %282 = vmatpush.xpose.msra.mxu0 %v256
    %283 = vmatpush.xpose.msra.mxu0 %v253
    %284 = vmatpush.xpose.msra.mxu0 %v250
    %285 = vmatpush.xpose.msra.mxu0 %v247
    %286 = vmatmul.f32.gmra.mxu0 %v235
    %v287 = vpop.f32.mrf.mxu0
    %v288 = vadd.f32 %v229, %v287
    %289 = vmatmul.f32.gmra.mxu0 %v238
    %v290 = vpop.f32.mrf.mxu0
    %v291 = vadd.f32 %v230, %v290
    %292 = vmatmul.f32.gmra.mxu0 %v241
    %v293 = vpop.f32.mrf.mxu0
    %v294 = vadd.f32 %v231, %v293
    %295 = vmatmul.f32.gmra.mxu0 %v244
    %v296 = vpop.f32.mrf.mxu0
    %v297 = vadd.f32 %v232, %v296
    %298 = vdwg.mxu0
    %v299 = vmax.f32 %v288, 0.0
    %v300 = vmax.f32 %v291, 0.0
    %v301 = vmax.f32 %v294, 0.0
    %v302 = vmax.f32 %v297, 0.0
    %304 = vset.pattern.permute.xlu0 0
    %305 = vperm.xlu0 %304, %v56
    %v306 = vpop.permute.xlu0 %305
    %309 = vset.pattern.permute.xlu0 0
    %310 = vperm.xlu0 %309, %v57
    %v311 = vpop.permute.xlu0 %310
    %314 = vset.pattern.permute.xlu0 0
    %315 = vperm.xlu0 %314, %v58
    %v316 = vpop.permute.xlu0 %315
    %319 = vset.pattern.permute.xlu0 0
    %320 = vperm.xlu0 %319, %v59
    %v321 = vpop.permute.xlu0 %320
    %v324 = vsel %vm213, %v52, 0
    %v327 = vsel %vm213, %v53, 0
    %v330 = vsel %vm213, %v54, 0
    %v333 = vsel %vm213, %v55, 0
    %335 = vmatpush.msra.mxu0 0.0
    %336 = vmatpush.msra.mxu0 0.0
    %337 = vmatpush.msra.mxu0 0.0
    %338 = vmatpush.msra.mxu0 0.0
    %339 = vmatpush.msra.mxu0 0.0
    %340 = vmatpush.msra.mxu0 0.0
    %341 = vmatpush.msra.mxu0 0.0
    %342 = vmatpush.msra.mxu0 0.0
    %343 = vmatpush.msra.mxu0 0.0
    %344 = vmatpush.msra.mxu0 0.0
    %345 = vmatpush.msra.mxu0 0.0
    %346 = vmatpush.msra.mxu0 0.0
    %347 = vmatpush.msra.mxu0 %v302
    %348 = vmatpush.msra.mxu0 %v301
    %349 = vmatpush.msra.mxu0 %v300
    %350 = vmatpush.msra.mxu0 %v299
    %351 = vmatmul.f32.gmra.mxu0 %v324
    %v352 = vpop.f32.mrf.mxu0
    %v353 = vadd.f32 %v306, %v352
    %354 = vmatmul.f32.gmra.mxu0 %v327
    %v355 = vpop.f32.mrf.mxu0
    %v356 = vadd.f32 %v311, %v355
    %357 = vmatmul.f32.gmra.mxu0 %v330
    %v358 = vpop.f32.mrf.mxu0
    %v359 = vadd.f32 %v316, %v358
    %360 = vmatmul.f32.gmra.mxu0 %v333
    %v361 = vpop.f32.mrf.mxu0
    %v362 = vadd.f32 %v321, %v361
    %363 = vdwg.mxu0
    %v364 = vmax.f32 %v353, 0.0
    %v365 = vmax.f32 %v356, 0.0
    %v366 = vmax.f32 %v359, 0.0
    %v367 = vmax.f32 %v362, 0.0
    %369 = vset.pattern.permute.xlu0 0
    %370 = vperm.xlu0 %369, %v60
    %v371 = vpop.permute.xlu0 %370
    %374 = vset.pattern.permute.xlu0 0
    %375 = vperm.xlu0 %374, %v61
    %v376 = vpop.permute.xlu0 %375
    %379 = vset.pattern.permute.xlu0 0
    %380 = vperm.xlu0 %379, %v62
    %v381 = vpop.permute.xlu0 %380
    %384 = vset.pattern.permute.xlu0 0
    %385 = vperm.xlu0 %384, %v63
    %v386 = vpop.permute.xlu0 %385
    %v388 = vmul.f32 %v371, %v364
    %v389 = vmul.f32 %v376, %v365
    %v390 = vmul.f32 %v381, %v366
    %v391 = vmul.f32 %v386, %v367
    %vm392 = vcmask 523264
    %v393 = vsel %vm392, %v388, 0.0
    %v394 = vsel %vm392, %v389, 0.0
    %v395 = vadd.f32 %v393, %v394
    %v396 = vsel %vm392, %v390, 0.0
    %v397 = vadd.f32 %v395, %v396
    %v398 = vsel %vm392, %v391, 0.0
    %v399 = vadd.f32 %v397, %v398
    %v400 = vrot.slane %v399, 4
    %v401 = vadd.f32 %v399, %v400
    %v402 = vrot.slane %v401, 2
    %v403 = vadd.f32 %v401, %v402
    %v404 = vrot.slane %v403, 1
    %v405 = vadd.f32 %v403, %v404
    %407 = vset.pattern.permute.xlu0 0
    %408 = vperm.xlu0 %407, %v64
    %v409 = vpop.permute.xlu0 %408
    %v411 = vperm.slane %v409, 0
    %v412 = vadd.f32 %v405, %v411
    %414 = vrot.lane.b32.xlu0 %v412, 120
    %v415 = vpop.permute.xlu0 %414
    %v417 = vmax.f32 %v412, %v415
    %418 = vrot.lane.b32.xlu0 %v412, 112
    %v419 = vpop.permute.xlu0 %418
    %v421 = vmax.f32 %v417, %v419
    %422 = vrot.lane.b32.xlu0 %v412, 104
    %v423 = vpop.permute.xlu0 %422
    %v425 = vmax.f32 %v421, %v423
    %426 = vrot.lane.b32.xlu0 %v412, 96
    %v427 = vpop.permute.xlu0 %426
    %v429 = vmax.f32 %v425, %v427
    %430 = vrot.lane.b32.xlu0 %v412, 88
    %v431 = vpop.permute.xlu0 %430
    %v433 = vmax.f32 %v429, %v431
    %434 = vrot.lane.b32.xlu0 %v412, 80
    %v435 = vpop.permute.xlu0 %434
    %v437 = vmax.f32 %v433, %v435
    %438 = vrot.lane.b32.xlu0 %v412, 72
    %v439 = vpop.permute.xlu0 %438
    %v441 = vmax.f32 %v437, %v439
    %v442 = vsub.f32 %v412, %v441
    %v443 = vmul.f32 %v442, 1.442695
    %v444 = vpow.pop %v443
    %446 = vrot.lane.b32.xlu0 %v441, 8
    %v447 = vpop.permute.xlu0 %446
    %v449 = vsub.f32 %v412, %v447
    %v450 = vmul.f32 %v449, 1.442695
    %v451 = vpow.pop %v450
    %452 = vrot.lane.b32.xlu0 %v441, 16
    %v453 = vpop.permute.xlu0 %452
    %v455 = vsub.f32 %v412, %v453
    %v456 = vmul.f32 %v455, 1.442695
    %v457 = vpow.pop %v456
    %458 = vrot.lane.b32.xlu0 %v441, 24
    %v459 = vpop.permute.xlu0 %458
    %v461 = vsub.f32 %v412, %v459
    %v462 = vmul.f32 %v461, 1.442695
    %v463 = vpow.pop %v462
    %464 = vrot.lane.b32.xlu0 %v441, 32
    %v465 = vpop.permute.xlu0 %464
    %v467 = vsub.f32 %v412, %v465
    %v468 = vmul.f32 %v467, 1.442695
    %v469 = vpow.pop %v468
    %470 = vrot.lane.b32.xlu0 %v441, 40
    %v471 = vpop.permute.xlu0 %470
    %v473 = vsub.f32 %v412, %v471
    %v474 = vmul.f32 %v473, 1.442695
    %v475 = vpow.pop %v474
    %476 = vrot.lane.b32.xlu0 %v441, 48
    %v477 = vpop.permute.xlu0 %476
    %v479 = vsub.f32 %v412, %v477
    %v480 = vmul.f32 %v479, 1.442695
    %v481 = vpow.pop %v480
    %482 = vrot.lane.b32.xlu0 %v441, 56
    %v483 = vpop.permute.xlu0 %482
    %v485 = vsub.f32 %v412, %v483
    %v486 = vmul.f32 %v485, 1.442695
    %v487 = vpow.pop %v486
    %489 = vrot.lane.b32.xlu0 %v451, 120
    %v490 = vpop.permute.xlu0 %489
    %v492 = vadd.f32 %v444, %v490
    %494 = vrot.lane.b32.xlu0 %v457, 112
    %v495 = vpop.permute.xlu0 %494
    %v497 = vadd.f32 %v492, %v495
    %499 = vrot.lane.b32.xlu0 %v463, 104
    %v500 = vpop.permute.xlu0 %499
    %v502 = vadd.f32 %v497, %v500
    %504 = vrot.lane.b32.xlu0 %v469, 96
    %v505 = vpop.permute.xlu0 %504
    %v507 = vadd.f32 %v502, %v505
    %509 = vrot.lane.b32.xlu0 %v475, 88
    %v510 = vpop.permute.xlu0 %509
    %v512 = vadd.f32 %v507, %v510
    %514 = vrot.lane.b32.xlu0 %v481, 80
    %v515 = vpop.permute.xlu0 %514
    %v517 = vadd.f32 %v512, %v515
    %519 = vrot.lane.b32.xlu0 %v487, 72
    %v520 = vpop.permute.xlu0 %519
    %v522 = vadd.f32 %v517, %v520
    %v523 = vrcp.pop %v522
    %v524 = vmul.f32 %v522, %v523
    %v525 = vsub.f32 1.0, %v524
    %v526 = vmul.f32 %v523, %v525
    %v527 = vadd.f32 %v523, %v526
    %vm528 = vweird.f32 %v522
    %vm529 = vweird.f32 %v523
    %vm530 = vmor %vm528, %vm529
    %v531 = vsel %vm530, %v523, %v527
    %v532 = vand.u32 2147483647, %v522
    %vm533 = vcmp.eq.f32.partialorder %v532, 8.507059e+37
    %v534 = vand.u32 %v522, 2147483648
    %v535 = vor.u32 1.1754944e-38, %v534
    %v536 = vsel %vm533, %v535, %v531
    %v537 = vmul.f32 %v444, %v536
    %539 = vrot.lane.b32.xlu0 %v522, 8
    %v540 = vpop.permute.xlu0 %539
    %v542 = vrcp.pop %v540
    %v543 = vmul.f32 %v540, %v542
    %v544 = vsub.f32 1.0, %v543
    %v545 = vmul.f32 %v542, %v544
    %v546 = vadd.f32 %v542, %v545
    %vm547 = vweird.f32 %v540
    %vm548 = vweird.f32 %v542
    %vm549 = vmor %vm547, %vm548
    %v550 = vsel %vm549, %v542, %v546
    %v551 = vand.u32 2147483647, %v540
    %vm552 = vcmp.eq.f32.partialorder %v551, 8.507059e+37
    %v553 = vand.u32 %v540, 2147483648
    %v554 = vor.u32 1.1754944e-38, %v553
    %v555 = vsel %vm552, %v554, %v550
    %v556 = vmul.f32 %v451, %v555
    %557 = vrot.lane.b32.xlu0 %v522, 16
    %v558 = vpop.permute.xlu0 %557
    %v560 = vrcp.pop %v558
    %v561 = vmul.f32 %v558, %v560
    %v562 = vsub.f32 1.0, %v561
    %v563 = vmul.f32 %v560, %v562
    %v564 = vadd.f32 %v560, %v563
    %vm565 = vweird.f32 %v558
    %vm566 = vweird.f32 %v560
    %vm567 = vmor %vm565, %vm566
    %v568 = vsel %vm567, %v560, %v564
    %v569 = vand.u32 2147483647, %v558
    %vm570 = vcmp.eq.f32.partialorder %v569, 8.507059e+37
    %v571 = vand.u32 %v558, 2147483648
    %v572 = vor.u32 1.1754944e-38, %v571
    %v573 = vsel %vm570, %v572, %v568
    %v574 = vmul.f32 %v457, %v573
    %575 = vrot.lane.b32.xlu0 %v522, 24
    %v576 = vpop.permute.xlu0 %575
    %v578 = vrcp.pop %v576
    %v579 = vmul.f32 %v576, %v578
    %v580 = vsub.f32 1.0, %v579
    %v581 = vmul.f32 %v578, %v580
    %v582 = vadd.f32 %v578, %v581
    %vm583 = vweird.f32 %v576
    %vm584 = vweird.f32 %v578
    %vm585 = vmor %vm583, %vm584
    %v586 = vsel %vm585, %v578, %v582
    %v587 = vand.u32 2147483647, %v576
    %vm588 = vcmp.eq.f32.partialorder %v587, 8.507059e+37
    %v589 = vand.u32 %v576, 2147483648
    %v590 = vor.u32 1.1754944e-38, %v589
    %v591 = vsel %vm588, %v590, %v586
    %v592 = vmul.f32 %v463, %v591
    %593 = vrot.lane.b32.xlu0 %v522, 32
    %v594 = vpop.permute.xlu0 %593
    %v596 = vrcp.pop %v594
    %v597 = vmul.f32 %v594, %v596
    %v598 = vsub.f32 1.0, %v597
    %v599 = vmul.f32 %v596, %v598
    %v600 = vadd.f32 %v596, %v599
    %vm601 = vweird.f32 %v594
    %vm602 = vweird.f32 %v596
    %vm603 = vmor %vm601, %vm602
    %v604 = vsel %vm603, %v596, %v600
    %v605 = vand.u32 2147483647, %v594
    %vm606 = vcmp.eq.f32.partialorder %v605, 8.507059e+37
    %v607 = vand.u32 %v594, 2147483648
    %v608 = vor.u32 1.1754944e-38, %v607
    %v609 = vsel %vm606, %v608, %v604
    %v610 = vmul.f32 %v469, %v609
    %611 = vrot.lane.b32.xlu0 %v522, 40
    %v612 = vpop.permute.xlu0 %611
    %v614 = vrcp.pop %v612
    %v615 = vmul.f32 %v612, %v614
    %v616 = vsub.f32 1.0, %v615
    %v617 = vmul.f32 %v614, %v616
    %v618 = vadd.f32 %v614, %v617
    %vm619 = vweird.f32 %v612
    %vm620 = vweird.f32 %v614
    %vm621 = vmor %vm619, %vm620
    %v622 = vsel %vm621, %v614, %v618
    %v623 = vand.u32 2147483647, %v612
    %vm624 = vcmp.eq.f32.partialorder %v623, 8.507059e+37
    %v625 = vand.u32 %v612, 2147483648
    %v626 = vor.u32 1.1754944e-38, %v625
    %v627 = vsel %vm624, %v626, %v622
    %v628 = vmul.f32 %v475, %v627
    %629 = vrot.lane.b32.xlu0 %v522, 48
    %v630 = vpop.permute.xlu0 %629
    %v632 = vrcp.pop %v630
    %v633 = vmul.f32 %v630, %v632
    %v634 = vsub.f32 1.0, %v633
    %v635 = vmul.f32 %v632, %v634
    %v636 = vadd.f32 %v632, %v635
    %vm637 = vweird.f32 %v630
    %vm638 = vweird.f32 %v632
    %vm639 = vmor %vm637, %vm638
    %v640 = vsel %vm639, %v632, %v636
    %v641 = vand.u32 2147483647, %v630
    %vm642 = vcmp.eq.f32.partialorder %v641, 8.507059e+37
    %v643 = vand.u32 %v630, 2147483648
    %v644 = vor.u32 1.1754944e-38, %v643
    %v645 = vsel %vm642, %v644, %v640
    %v646 = vmul.f32 %v481, %v645
    %647 = vrot.lane.b32.xlu0 %v522, 56
    %v648 = vpop.permute.xlu0 %647
    %v650 = vrcp.pop %v648
    %v651 = vmul.f32 %v648, %v650
    %v652 = vsub.f32 1.0, %v651
    %v653 = vmul.f32 %v650, %v652
    %v654 = vadd.f32 %v650, %v653
    %vm655 = vweird.f32 %v648
    %vm656 = vweird.f32 %v650
    %vm657 = vmor %vm655, %vm656
    %v658 = vsel %vm657, %v650, %v654
    %v659 = vand.u32 2147483647, %v648
    %vm660 = vcmp.eq.f32.partialorder %v659, 8.507059e+37
    %v661 = vand.u32 %v648, 2147483648
    %v662 = vor.u32 1.1754944e-38, %v661
    %v663 = vsel %vm660, %v662, %v658
    %v664 = vmul.f32 %v487, %v663
    %v665 = vsel %vm198, %v537, %v556
    %v666 = vsel %vm203, %v665, %v574
    %v667 = vsel %vm208, %v666, %v592
    %v668 = vsel %vm213, %v667, %v610
    %v669 = vsel %vm218, %v668, %v628
    %v670 = vsel %vm223, %v669, %v646
    %v671 = vsel %vm228, %v670, %v664
    %vm672 = vcmask 516096
    %673 = vst.msk [vmem:[#allocation3] sm:$0x1] %vm672, %v671
    %674 = vrot.lane.b32.xlu0 %v412, 8
    %v675 = vpop.permute.xlu0 %674
    %vm677 = vcmp.gt.f32.partialorder %v412, %v675
    %v678 = vsel %vm677, 1, 0
    %v679 = vsel %vm677, %v412, %v675
    %681 = vrot.lane.b32.xlu0 %v679, 8
    %v682 = vpop.permute.xlu0 %681
    %vm684 = vcmp.gt.f32.partialorder %v412, %v682
    %685 = vrot.lane.b32.xlu0 %v678, 8
    %v686 = vpop.permute.xlu0 %685
    %v687 = vsel %vm684, 2, %v686
    %v688 = vsel %vm684, %v412, %v682
    %690 = vrot.lane.b32.xlu0 %v688, 8
    %v691 = vpop.permute.xlu0 %690
    %vm693 = vcmp.gt.f32.partialorder %v412, %v691
    %694 = vrot.lane.b32.xlu0 %v687, 8
    %v695 = vpop.permute.xlu0 %694
    %v696 = vsel %vm693, 3, %v695
    %v697 = vsel %vm693, %v412, %v691
    %699 = vrot.lane.b32.xlu0 %v697, 8
    %v700 = vpop.permute.xlu0 %699
    %vm702 = vcmp.gt.f32.partialorder %v412, %v700
    %703 = vrot.lane.b32.xlu0 %v696, 8
    %v704 = vpop.permute.xlu0 %703
    %v705 = vsel %vm702, 4, %v704
    %v706 = vsel %vm702, %v412, %v700
    %708 = vrot.lane.b32.xlu0 %v706, 8
    %v709 = vpop.permute.xlu0 %708
    %vm711 = vcmp.gt.f32.partialorder %v412, %v709
    %712 = vrot.lane.b32.xlu0 %v705, 8
    %v713 = vpop.permute.xlu0 %712
    %v714 = vsel %vm711, 5, %v713
    %v715 = vsel %vm711, %v412, %v709
    %717 = vrot.lane.b32.xlu0 %v715, 8
    %v718 = vpop.permute.xlu0 %717
    %vm720 = vcmp.gt.f32.partialorder %v412, %v718
    %721 = vrot.lane.b32.xlu0 %v714, 8
    %v722 = vpop.permute.xlu0 %721
    %v723 = vsel %vm720, 6, %v722
    %v724 = vsel %vm720, %v412, %v718
    %726 = vrot.lane.b32.xlu0 %v724, 8
    %v727 = vpop.permute.xlu0 %726
    %vm729 = vcmp.gt.f32.partialorder %v412, %v727
    %730 = vrot.lane.b32.xlu0 %v723, 8
    %v731 = vpop.permute.xlu0 %730
    %v732 = vsel %vm729, 7, %v731
    %733 = vrot.lane.b32.xlu0 %v732, 72
    %v734 = vpop.permute.xlu0 %733
    %vm735 = vcmask 57344
    %736 = vst.msk [vmem:[#allocation5] sm:$0x1] %vm735, %v734
    // Predicated region
    $region34: #{tpu_custom_call.1} parent=1 // pred_check
      _
    $region35: #{tpu_custom_call.1} parent=1 // pred_check_branch
      %738 = sbr.rel (0) target = $region37
    $region36: #{tpu_custom_call.1} parent=1 // pred_region
      %740 = vsyncadd [#allocation4], 0
      %s742 = sshll.u32 [#allocation3], 4
      %s743 = int_to_ptr.vmem [resolvable:$true] %s742
      %s744 = sshll.u32 %s8, 4
      %s745 = int_to_ptr.hbm [resolvable:$true] %s744
      %747 = dma.vmem_to_hbm [thread:$0]  %s743, 16, %s745, [#allocation4]
    $region37: #{tpu_custom_call.1} parent=1 // pred_fallthru
      _
    // Predicated region
    $region38: #{tpu_custom_call.1} parent=1 // pred_check
      _
    $region39: #{tpu_custom_call.1} parent=1 // pred_check_branch
      %749 = sbr.rel (0) target = $region41
    $region40: #{tpu_custom_call.1} parent=1 // pred_region
      %751 = vsyncadd [#allocation6], 0
      %s753 = sshll.u32 [#allocation5], 4
      %s754 = int_to_ptr.vmem [resolvable:$true] %s753
      %s755 = sshll.u32 %s9, 4
      %s756 = int_to_ptr.hbm [resolvable:$true] %s755
      %758 = dma.vmem_to_hbm [thread:$0]  %s754, 16, %s756, [#allocation6]
    $region41: #{tpu_custom_call.1} parent=1 // pred_fallthru
      _
    // Predicated region
    $region42: #{tpu_custom_call.1} parent=1 // pred_check
      _
    $region43: #{tpu_custom_call.1} parent=1 // pred_check_branch
      %760 = sbr.rel (0) target = $region45
    $region44: #{tpu_custom_call.1} parent=1 // pred_region
      %762 = dma.done [#allocation4], 16
    $region45: #{tpu_custom_call.1} parent=1 // pred_fallthru
      _
    // Predicated region
    $region46: #{tpu_custom_call.1} parent=1 // pred_check
      _
    $region47: #{tpu_custom_call.1} parent=1 // pred_check_branch
      %764 = sbr.rel (0) target = $region49
    $region48: #{tpu_custom_call.1} parent=1 // pred_region
      %766 = dma.done [#allocation6], 16
    $region49: #{tpu_custom_call.1} parent=1 // pred_fallthru
      _
    %767 = vsyncpa [#allocation4], 1
    %768 = vsyncpa [#allocation6], 1

</llo_original>
